<compile_context>
chip_gen: v7x
topology: tpu7x:2x2x1
jax: 0.10.0
libtpu: 0.0.40
codegen_flags: <defaults>
</compile_context>

<pallas_src>
import math
import functools

import jax
import jax.numpy as jnp
from jax.experimental import pallas as pl
from jax.experimental.pallas import tpu as pltpu

LN_EPS = 1e-5
NEG_INF = jnp.finfo(jnp.float32).min


def _gelu_new(x):
    # GPT-2 "gelu_new"
    return 0.5 * x * (1.0 + jnp.tanh(math.sqrt(2.0 / math.pi) * (x + 0.044715 * x * x * x)))


def _layernorm(x, g, b):
    mu = jnp.mean(x, axis=-1, keepdims=True)
    var = jnp.mean((x - mu) ** 2, axis=-1, keepdims=True)
    return (x - mu) * jax.lax.rsqrt(var + LN_EPS) * g + b


def _mm(a, b):  # (M,K)@(K,N) on the MXU in bf16, f32 accumulation
    return jax.lax.dot_general(a.astype(jnp.bfloat16), b.astype(jnp.bfloat16),
                               (((1,), (0,)), ((), ())),
                               preferred_element_type=jnp.float32)


def _mm_nt(a, b):  # (M,K)@(N,K)^T
    return jax.lax.dot_general(a.astype(jnp.bfloat16), b.astype(jnp.bfloat16),
                               (((1,), (1,)), ((), ())),
                               preferred_element_type=jnp.float32)


# --------------------------- pass 1: ln_1 + QKV ------------------------------
def _qkv_kernel(x_ref, g1_ref, b1_ref, Wqkv_ref, bqkv_ref, q_ref, kv_ref):
    x = x_ref[0].astype(jnp.float32)                       # (tq, D)
    D = x.shape[1]
    h = _layernorm(x, g1_ref[0], b1_ref[0])
    qkv = _mm(h, Wqkv_ref[...]) + bqkv_ref[0]              # (tq, 3D) f32
    q_ref[0] = qkv[:, :D].astype(q_ref.dtype)
    kv_ref[0] = qkv[:, D:].astype(kv_ref.dtype)


# ---- pass 2: flash attention + c_proj + residual + ln2 + MLP + Hopfield -----
def _block_kernel(x_ref, q_ref, kv_ref,
                  Wap_ref, bap_ref, g2_ref, b2_ref,
                  Wfc_ref, bfc_ref, Wmp_ref, bmp_ref, hbias_ref,
                  o_ref, *, num_heads):
    qi = pl.program_id(1)

    x = x_ref[0].astype(jnp.float32)                       # (tq, D)
    tq, D = x.shape
    hd = D // num_heads
    tk = tq                                                # K tile == Q tile (causal tiling)

    scale = 1.0 / math.sqrt(hd)
    q_all = (q_ref[0].astype(jnp.float32) * scale).astype(jnp.bfloat16)  # pre-scaled queries
    Wap = Wap_ref[...]                                     # (D, D) bf16, loaded once

    # Per-tile causal mask pieces built from program_id offsets (no (S,S) mask).
    q_pos = qi * tq + jax.lax.broadcasted_iota(jnp.int32, (tq, tk), 0)

    def k_step(kt, carry):
        off = pl.multiple_of(kt * tk, tk)
        kv_t = kv_ref[0, pl.ds(off, tk), :]                # (tk, 2D), loaded once per K tile
        k_t = kv_t[:, :D].astype(jnp.bfloat16)
        v_t = kv_t[:, D:].astype(jnp.bfloat16)
        k_pos = off + jax.lax.broadcasted_iota(jnp.int32, (tq, tk), 1)
        mask = q_pos >= k_pos
        new = []
        for h in range(num_heads):
            lo, hi = h * hd, (h + 1) * hd
            m, l, acc = carry[h]
            s = _mm_nt(q_all[:, lo:hi], k_t[:, lo:hi])     # (tq, tk) f32
            s = jnp.where(mask, s, NEG_INF)
            m_new = jnp.maximum(m, jnp.max(s, axis=-1, keepdims=True))
            alpha = jnp.exp(m - m_new)
            p = jnp.exp(s - m_new)
            l_new = alpha * l + jnp.sum(p, axis=-1, keepdims=True)
            pv = _mm(p, v_t[:, lo:hi])                     # (tq, hd) f32
            new.append((m_new, l_new, alpha * acc + pv))
        return tuple(new)

    init = tuple((jnp.full((tq, 1), -jnp.inf, jnp.float32),
                  jnp.zeros((tq, 1), jnp.float32),
                  jnp.zeros((tq, hd), jnp.float32)) for _ in range(num_heads))
    # Causal: only K tiles <= current Q tile are visited (dynamic trip count).
    state = jax.lax.fori_loop(0, qi + 1, k_step, init)

    # Per-head accumulation straight into the output projection (no concat).
    attn = jnp.zeros((tq, D), jnp.float32)
    for h in range(num_heads):
        lo, hi = h * hd, (h + 1) * hd
        m, l, acc = state[h]
        out_h = acc * pl.reciprocal(l, approx=True)        # EUP reciprocal
        attn = attn + _mm(out_h, Wap[lo:hi, :])
    attn = attn + bap_ref[0]

    h1 = x + attn
    h2 = _layernorm(h1, g2_ref[0], b2_ref[0])
    ff = _mm(h2, Wfc_ref[...]) + bfc_ref[0]
    ff = _gelu_new(ff)                                     # f32 tanh on the EUP
    ff = _mm(ff, Wmp_ref[...]) + bmp_ref[0]

    o_ref[0] = (hbias_ref[0] + h1 + ff).astype(o_ref.dtype)


# --------------------------------- wrapper -----------------------------------
def _seq_tile(S):
    for t in (512, 256, 128, 64, 32, 16, 8):
        if t <= S and S % t == 0:
            return t
    return S


def _rep_spec(a):
    n = a.ndim
    return pl.BlockSpec(a.shape, lambda b, s, _n=n: (0,) * _n)


def _compiler_params(vmem_limit_bytes):
    kwargs = dict(dimension_semantics=("parallel", "parallel"))
    if vmem_limit_bytes is not None:
        kwargs["vmem_limit_bytes"] = vmem_limit_bytes
    return pltpu.CompilerParams(**kwargs)


def hopfield_gpt_block(x, hop_params, gpt_params, num_heads, *,
                       q_tile=None, vmem_limit_bytes=None):
    """Fused HopfieldGPTBlock forward.

    hop_params: (hgq, hbq, hWq, hbq2, hK, hV, hWo, hbo) -- state-pattern LN, q
      in_proj, pre-folded stored-pattern keys/values (Q, D), out_proj.
    gpt_params: (g1, b1, Wqkv, bqkv, Wap, bap, g2, b2, Wfc, bfc, Wmp, bmp).
    """
    hgq, hbq, hWq, hbq2, hK, hV, hWo, hbo = hop_params
    g1, b1, Wqkv, bqkv, Wap, bap, g2, b2, Wfc, bfc, Wmp, bmp = gpt_params
    del hgq, hbq, hWq, hbq2   # dead for quantity=1: softmax over one pattern == 1

    B, S, D = x.shape
    assert D % num_heads == 0
    if hK.shape[0] != 1:
        # TODO(synk): quantity>1 Hopfield lookup (pad Q to >=128 lanes and run the
        # query/softmax in-kernel); hflayers.HopfieldLayer default is quantity=1.
        raise NotImplementedError("only the default HopfieldLayer quantity=1 is fused")

    f32, bf16 = jnp.float32, jnp.bfloat16
    # quantity=1 => Hopfield branch collapses to an x-independent (1, D) bias.
    mem_bias = hV.astype(f32) @ hWo.astype(f32) + hbo.reshape(1, D).astype(f32)

    tq = q_tile if q_tile is not None else _seq_tile(S)
    assert S % tq == 0
    n_t = S // tq
    cp = _compiler_params(vmem_limit_bytes)
    xd_spec = pl.BlockSpec((1, tq, D), lambda b, s: (b, s, 0))

    # ---- pass 1: ln_1 + fused QKV projection (bf16 MXU, f32 accumulate) ----
    p1_args = [x,
               g1.reshape(1, D).astype(f32), b1.reshape(1, D).astype(f32),
               Wqkv.astype(bf16), bqkv.reshape(1, 3 * D).astype(f32)]
    q_proj, kv_proj = pl.pallas_call(
        _qkv_kernel,
        out_shape=(jax.ShapeDtypeStruct((B, S, D), bf16),
                   jax.ShapeDtypeStruct((B, S, 2 * D), bf16)),
        grid=(B, n_t),
        in_specs=[xd_spec] + [_rep_spec(a) for a in p1_args[1:]],
        out_specs=(xd_spec, pl.BlockSpec((1, tq, 2 * D), lambda b, s: (b, s, 0))),
        compiler_params=cp,
    )(*p1_args)

    # ---- pass 2: flash attention + c_proj + MLP + residuals + Hopfield bias ----
    p2_args = [x, q_proj, kv_proj,
               Wap.astype(bf16), bap.reshape(1, D).astype(f32),
               g2.reshape(1, D).astype(f32), b2.reshape(1, D).astype(f32),
               Wfc.astype(bf16), bfc.reshape(1, 4 * D).astype(f32),
               Wmp.astype(bf16), bmp.reshape(1, D).astype(f32),
               mem_bias.astype(f32)]
    out = pl.pallas_call(
        functools.partial(_block_kernel, num_heads=num_heads),
        out_shape=jax.ShapeDtypeStruct((B, S, D), x.dtype),
        grid=(B, n_t),
        in_specs=[xd_spec, xd_spec,
                  pl.BlockSpec((1, S, 2 * D), lambda b, s: (b, 0, 0))]  # K/V resident per batch
                 + [_rep_spec(a) for a in p2_args[3:]],
        out_specs=xd_spec,
        compiler_params=cp,
    )(*p2_args)
    return out


# ------------------------------- reference -----------------------------------
def reference(x, hop_params, gpt_params, num_heads):
    """Pure-JAX (f32) reference of the same forward pass."""
    hgq, hbq, hWq, hbq2, hK, hV, hWo, hbo = hop_params
    g1, b1, Wqkv, bqkv, Wap, bap, g2, b2, Wfc, bfc, Wmp, bmp = gpt_params
    B, S, D = x.shape
    hd = D // num_heads

    def ln(v, g, b):
        mu = jnp.mean(v, -1, keepdims=True)
        var = jnp.mean((v - mu) ** 2, -1, keepdims=True)
        return (v - mu) * jax.lax.rsqrt(var + LN_EPS) * g + b

    # Hopfield lookup (full math, including the degenerate Q=1 softmax).
    qh = ln(x, hgq, hbq) @ hWq + hbq2
    sh = (qh @ hK.T) * (1.0 / math.sqrt(D))
    ah = jax.nn.softmax(sh, axis=-1)
    mem = (ah @ hV) @ hWo + hbo

    # GPT-2 block.
    h = ln(x, g1, b1)
    qkv = h @ Wqkv + bqkv
    q, k, v = jnp.split(qkv, 3, axis=-1)
    rs = lambda t: t.reshape(B, S, num_heads, hd).transpose(0, 2, 1, 3)
    q, k, v = rs(q), rs(k), rs(v)
    s = jnp.einsum("bhqd,bhkd->bhqk", q, k) * (1.0 / math.sqrt(hd))
    mask = jnp.tril(jnp.ones((S, S), bool))
    s = jnp.where(mask, s, NEG_INF)
    p = jax.nn.softmax(s, axis=-1)
    a = jnp.einsum("bhqk,bhkd->bhqd", p, v).transpose(0, 2, 1, 3).reshape(B, S, D)
    a = a @ Wap + bap
    h1 = x + a
    h2 = ln(h1, g2, b2)
    ff = _gelu_new(h2 @ Wfc + bfc) @ Wmp + bmp
    return mem + h1 + ff


if __name__ == "__main__":
    B, S, D, H, Q = 2, 8, 32, 4, 1   # Q = Hopfield quantity (hflayers default)
    key = jax.random.PRNGKey(0)
    keys = iter(jax.random.split(key, 40))

    def nrm(shape, scale=0.05):
        return (scale * jax.random.normal(next(keys), shape)).astype(jnp.float32)

    x = nrm((B, S, D), 1.0)

    # ----- Hopfield layer parameters (deterministic synthetic init) -----
    Y = nrm((Q, D), 0.1)                                   # lookup_weights
    h_gk, h_bk = 1.0 + nrm((D,), 0.02), nrm((D,), 0.02)    # norm_stored_pattern
    h_gq, h_bq = 1.0 + nrm((D,), 0.02), nrm((D,), 0.02)    # norm_state_pattern
    h_gv, h_bv = 1.0 + nrm((D,), 0.02), nrm((D,), 0.02)    # norm_pattern_projection
    hWq, hWk, hWv = nrm((D, D)), nrm((D, D)), nrm((D, D))  # in_proj (q/k/v)
    hbq2, hbk2, hbv2 = nrm((D,), 0.01), nrm((D,), 0.01), nrm((D,), 0.01)
    hWo, hbo = nrm((D, D)), nrm((D,), 0.01)                # out_proj

    # Parameter-only glue: stored-pattern / projection LayerNorm + K/V projection
    # depend only on parameters, so they are folded host-side.
    def _ln_host(v, g, b):
        mu = jnp.mean(v, -1, keepdims=True)
        var = jnp.mean((v - mu) ** 2, -1, keepdims=True)
        return (v - mu) * jax.lax.rsqrt(var + LN_EPS) * g + b

    hK = _ln_host(Y, h_gk, h_bk) @ hWk + hbk2              # (Q, D)
    hV = _ln_host(Y, h_gv, h_bv) @ hWv + hbv2              # (Q, D)
    hop_params = (h_gq, h_bq, hWq, hbq2, hK, hV, hWo, hbo)

    # ----- GPT-2 block parameters -----
    g1, b1 = 1.0 + nrm((D,), 0.02), nrm((D,), 0.02)
    Wqkv, bqkv = nrm((D, 3 * D)), nrm((3 * D,), 0.01)      # attn.c_attn (Conv1D)
    Wap, bap = nrm((D, D)), nrm((D,), 0.01)                # attn.c_proj
    g2, b2 = 1.0 + nrm((D,), 0.02), nrm((D,), 0.02)
    Wfc, bfc = nrm((D, 4 * D)), nrm((4 * D,), 0.01)        # mlp.c_fc
    Wmp, bmp = nrm((4 * D, D)), nrm((D,), 0.01)            # mlp.c_proj
    gpt_params = (g1, b1, Wqkv, bqkv, Wap, bap, g2, b2, Wfc, bfc, Wmp, bmp)

    out = hopfield_gpt_block(x, hop_params, gpt_params, num_heads=H)
    out = jax.block_until_ready(out)

    ref = reference(x, hop_params, gpt_params, num_heads=H)
    assert out.shape == (B, S, D)
    # bf16 MXU inputs (weights + activations) vs f32 reference -> loose-ish tolerance.
    assert jnp.allclose(out, ref, atol=1e-2, rtol=1e-2), (
        "Pallas kernel mismatch vs JAX reference, max abs err = "
        f"{float(jnp.max(jnp.abs(out - ref))):.3e}")

    # TODO(synk): use_cache / output_attentions side outputs of GPT2Block are not
    # materialized (disabled by the module's default forward arguments).
    print("KERNEL_OK")
</pallas_src>

<mosaic_0001>
module attributes {stable_mosaic.version = 11 : i64} {
  func.func @_qkv_kernel(%arg0: i32, %arg1: i32, %arg2: memref<1x8x32xf32, #tpu.memory_space<vmem>>, %arg3: memref<1x32xf32, #tpu.memory_space<vmem>>, %arg4: memref<1x32xf32, #tpu.memory_space<vmem>>, %arg5: memref<32x96xbf16, #tpu.memory_space<vmem>>, %arg6: memref<1x96xf32, #tpu.memory_space<vmem>>, %arg7: memref<1x8x32xbf16, #tpu.memory_space<vmem>>, %arg8: memref<1x8x64xbf16, #tpu.memory_space<vmem>>) attributes {dimension_semantics = [#tpu.dimension_semantics<parallel>, #tpu.dimension_semantics<parallel>], iteration_bounds = array<i64: 2, 1>, scalar_prefetch = 0 : i64, scratch_operands = 0 : i64, tpu.core_type = #tpu.core_type<tc>, window_params = [{transform_indices = @transform_0, window_bounds = array<i64: 1, 8, 32>}, {pipeline_mode = #tpu.pipeline_mode<synchronous>, transform_indices = @transform_1, window_bounds = array<i64: 1, 32>}, {pipeline_mode = #tpu.pipeline_mode<synchronous>, transform_indices = @transform_2, window_bounds = array<i64: 1, 32>}, {pipeline_mode = #tpu.pipeline_mode<synchronous>, transform_indices = @transform_3, window_bounds = array<i64: 32, 96>}, {pipeline_mode = #tpu.pipeline_mode<synchronous>, transform_indices = @transform_4, window_bounds = array<i64: 1, 96>}, {transform_indices = @transform_5, window_bounds = array<i64: 1, 8, 32>}, {transform_indices = @transform_6, window_bounds = array<i64: 1, 8, 64>}]} {
    %c0 = arith.constant 0 : index
    %c0_0 = arith.constant 0 : index
    %c0_1 = arith.constant 0 : index
    %0 = vector.load %arg2[%c0, %c0_0, %c0_1] : memref<1x8x32xf32, #tpu.memory_space<vmem>>, vector<1x8x32xf32>
    %1 = vector.shape_cast %0 : vector<1x8x32xf32> to vector<8x32xf32>
    %c0_2 = arith.constant 0 : index
    %c0_3 = arith.constant 0 : index
    %2 = vector.load %arg3[%c0_2, %c0_3] : memref<1x32xf32, #tpu.memory_space<vmem>>, vector<1x32xf32>
    %3 = vector.shape_cast %2 : vector<1x32xf32> to vector<32xf32>
    %c0_4 = arith.constant 0 : index
    %c0_5 = arith.constant 0 : index
    %4 = vector.load %arg4[%c0_4, %c0_5] : memref<1x32xf32, #tpu.memory_space<vmem>>, vector<1x32xf32>
    %5 = vector.shape_cast %4 : vector<1x32xf32> to vector<32xf32>
    %cst = arith.constant dense<0.000000e+00> : vector<8xf32>
    %6 = vector.multi_reduction <add>, %1, %cst [1] : vector<8x32xf32> to vector<8xf32>
    %7 = vector.shape_cast %6 : vector<8xf32> to vector<8x1xf32>
    %cst_6 = arith.constant 3.200000e+01 : f32
    %8 = vector.broadcast %cst_6 : f32 to vector<8x1xf32>
    %9 = arith.divf %7, %8 : vector<8x1xf32>
    %10 = vector.broadcast %9 : vector<8x1xf32> to vector<8x32xf32>
    %11 = arith.subf %1, %10 : vector<8x32xf32>
    %12 = arith.mulf %11, %11 : vector<8x32xf32>
    %cst_7 = arith.constant dense<0.000000e+00> : vector<8xf32>
    %13 = vector.multi_reduction <add>, %12, %cst_7 [1] : vector<8x32xf32> to vector<8xf32>
    %14 = vector.shape_cast %13 : vector<8xf32> to vector<8x1xf32>
    %cst_8 = arith.constant 3.200000e+01 : f32
    %15 = vector.broadcast %cst_8 : f32 to vector<8x1xf32>
    %16 = arith.divf %14, %15 : vector<8x1xf32>
    %17 = vector.broadcast %9 : vector<8x1xf32> to vector<8x32xf32>
    %18 = arith.subf %1, %17 : vector<8x32xf32>
    %cst_9 = arith.constant 9.99999974E-6 : f32
    %19 = vector.broadcast %cst_9 : f32 to vector<8x1xf32>
    %20 = arith.addf %16, %19 : vector<8x1xf32>
    %21 = math.rsqrt %20 : vector<8x1xf32>
    %22 = vector.broadcast %21 : vector<8x1xf32> to vector<8x32xf32>
    %23 = arith.mulf %18, %22 : vector<8x32xf32>
    %24 = vector.shape_cast %3 : vector<32xf32> to vector<1x32xf32>
    %25 = vector.broadcast %24 : vector<1x32xf32> to vector<8x32xf32>
    %26 = arith.mulf %23, %25 : vector<8x32xf32>
    %27 = vector.shape_cast %5 : vector<32xf32> to vector<1x32xf32>
    %28 = vector.broadcast %27 : vector<1x32xf32> to vector<8x32xf32>
    %29 = arith.addf %26, %28 : vector<8x32xf32>
    %c0_10 = arith.constant 0 : index
    %c0_11 = arith.constant 0 : index
    %30 = vector.load %arg5[%c0_10, %c0_11] : memref<32x96xbf16, #tpu.memory_space<vmem>>, vector<32x96xbf16>
    %31 = arith.truncf %29 : vector<8x32xf32> to vector<8x32xbf16>
    %cst_12 = arith.constant dense<0.000000e+00> : vector<8x96xf32>
    %32 = tpu.matmul %31, %30, %cst_12 {dimension_numbers = #tpu.dot_dimension_numbers<[1], [0], [0], [1], [0, 0, 1, 1], [], []>} : vector<8x32xbf16>, vector<32x96xbf16>, vector<8x96xf32> -> vector<8x96xf32>
    %c0_13 = arith.constant 0 : index
    %c0_14 = arith.constant 0 : index
    %33 = vector.load %arg6[%c0_13, %c0_14] : memref<1x96xf32, #tpu.memory_space<vmem>>, vector<1x96xf32>
    %34 = vector.shape_cast %33 : vector<1x96xf32> to vector<96xf32>
    %35 = vector.shape_cast %34 : vector<96xf32> to vector<1x96xf32>
    %36 = vector.broadcast %35 : vector<1x96xf32> to vector<8x96xf32>
    %37 = arith.addf %32, %36 : vector<8x96xf32>
    %38 = vector.extract_strided_slice %37 {offsets = [0, 0], sizes = [8, 32], strides = [1, 1]} : vector<8x96xf32> to vector<8x32xf32>
    %39 = arith.truncf %38 : vector<8x32xf32> to vector<8x32xbf16>
    %c0_15 = arith.constant 0 : index
    %c0_16 = arith.constant 0 : index
    %c0_17 = arith.constant 0 : index
    %40 = vector.load %arg7[%c0_15, %c0_16, %c0_17] : memref<1x8x32xbf16, #tpu.memory_space<vmem>>, vector<1x8x32xbf16>
    %41 = vector.shape_cast %40 : vector<1x8x32xbf16> to vector<8x32xbf16>
    %42 = vector.shape_cast %39 : vector<8x32xbf16> to vector<1x8x32xbf16>
    tpu.vector_store %arg7[%c0_15, %c0_16, %c0_17], %42 {strides = array<i32>} : memref<1x8x32xbf16, #tpu.memory_space<vmem>>, vector<1x8x32xbf16>,
    %43 = vector.extract_strided_slice %37 {offsets = [0, 32], sizes = [8, 64], strides = [1, 1]} : vector<8x96xf32> to vector<8x64xf32>
    %44 = arith.truncf %43 : vector<8x64xf32> to vector<8x64xbf16>
    %c0_18 = arith.constant 0 : index
    %c0_19 = arith.constant 0 : index
    %c0_20 = arith.constant 0 : index
    %45 = vector.load %arg8[%c0_18, %c0_19, %c0_20] : memref<1x8x64xbf16, #tpu.memory_space<vmem>>, vector<1x8x64xbf16>
    %46 = vector.shape_cast %45 : vector<1x8x64xbf16> to vector<8x64xbf16>
    %47 = vector.shape_cast %44 : vector<8x64xbf16> to vector<1x8x64xbf16>
    tpu.vector_store %arg8[%c0_18, %c0_19, %c0_20], %47 {strides = array<i32>} : memref<1x8x64xbf16, #tpu.memory_space<vmem>>, vector<1x8x64xbf16>,
    return
  }
  func.func @transform_0(%arg0: i32, %arg1: i32) -> (i32, i32, i32) {
    %c0_i32 = arith.constant 0 : i32
    %c0_i32_0 = arith.constant 0 : i32
    return %arg0, %arg1, %c0_i32 : i32, i32, i32
  }
  func.func @transform_1(%arg0: i32, %arg1: i32) -> (i32, i32) {
    %c0_i32 = arith.constant 0 : i32
    %c0_i32_0 = arith.constant 0 : i32
    %c0_i32_1 = arith.constant 0 : i32
    return %c0_i32, %c0_i32_0 : i32, i32
  }
  func.func @transform_2(%arg0: i32, %arg1: i32) -> (i32, i32) {
    %c0_i32 = arith.constant 0 : i32
    %c0_i32_0 = arith.constant 0 : i32
    %c0_i32_1 = arith.constant 0 : i32
    return %c0_i32, %c0_i32_0 : i32, i32
  }
  func.func @transform_3(%arg0: i32, %arg1: i32) -> (i32, i32) {
    %c0_i32 = arith.constant 0 : i32
    %c0_i32_0 = arith.constant 0 : i32
    %c0_i32_1 = arith.constant 0 : i32
    return %c0_i32, %c0_i32_0 : i32, i32
  }
  func.func @transform_4(%arg0: i32, %arg1: i32) -> (i32, i32) {
    %c0_i32 = arith.constant 0 : i32
    %c0_i32_0 = arith.constant 0 : i32
    %c0_i32_1 = arith.constant 0 : i32
    return %c0_i32, %c0_i32_0 : i32, i32
  }
  func.func @transform_5(%arg0: i32, %arg1: i32) -> (i32, i32, i32) {
    %c0_i32 = arith.constant 0 : i32
    %c0_i32_0 = arith.constant 0 : i32
    return %arg0, %arg1, %c0_i32 : i32, i32, i32
  }
  func.func @transform_6(%arg0: i32, %arg1: i32) -> (i32, i32, i32) {
    %c0_i32 = arith.constant 0 : i32
    %c0_i32_0 = arith.constant 0 : i32
    return %arg0, %arg1, %c0_i32 : i32, i32, i32
  }
}

</mosaic_0001>

<llo_original>
// kernel: tpu_custom_call.1
$region0: #{tpu_custom_call.1}
  #allocation0 [shape = 'u32[]', space=smem, size = 0x4, offset = 0x4, fixed_abs, tag = 'smem constant byte address 0x4 - core index']
  #allocation1 [shape = 'u32[144,128]{1,0:T(1,128)}', space=vmem, size = 0x12000, scoped, tag = 'internal scratch']
  %s0 = inlined_call_operand.hbm [shape: f32[2,8,32], index: 0, kind: input, shape index: {}]
  %s1 = inlined_call_operand.vmem [shape: f32[1,32], index: 1, kind: input, shape index: {}]
  %s2 = inlined_call_operand.vmem [shape: f32[1,32], index: 2, kind: input, shape index: {}]
  %s3 = inlined_call_operand.hbm [shape: bf16[32,96], index: 3, kind: input, shape index: {}]
  %s4 = inlined_call_operand.vmem [shape: f32[1,96], index: 4, kind: input, shape index: {}]
  %s5 = inlined_call_operand.hbm [shape: bf16[2,8,32], index: 5, kind: output, shape index: {0}]
  %s6 = inlined_call_operand.hbm [shape: bf16[2,8,64], index: 6, kind: output, shape index: {1}]
  %7 = xla_tuple %s5, %s6
  %s8 = sld [smem:[#allocation0]]
  $region69: #{tpu_custom_call.1} parent=0
    _
  %s10 = ssub.s32 1, %s8
  %s11 = scalar_select 0, %s10, %s8
  $region1: #{tpu_custom_call.1} parent=0
    #allocation2 [shape = 'u8[8192]{0}', space=vmem, size = 0x2000, scoped, tag = 'input window, operand 0']
    #allocation3 [shape = 's32[2]{0}', space=sflag, size = 0x8, scoped, tag = 'scoped memory for tpu_custom_call.1']
    #allocation4 [shape = 's32[2]{0}', space=sflag, size = 0x8, scoped, tag = 'scoped memory for tpu_custom_call.1']
    #allocation5 [shape = 'u8[8192]{0}', space=vmem, size = 0x2000, scoped, tag = 'input window, operand 3, single buffered']
    #allocation6 [shape = 's32[1]{0}', space=sflag, size = 0x4, scoped, tag = 'scoped memory for tpu_custom_call.1']
    #allocation7 [shape = 'u8[4096]{0}', space=vmem, size = 0x1000, scoped, tag = 'output window, operand 0']
    #allocation8 [shape = 'u8[4096]{0}', space=vmem, size = 0x1000, scoped, tag = 'output window, operand 1']
    #allocation9 [shape = 's32[2]{0}', space=sflag, size = 0x8, scoped, tag = 'scoped memory for tpu_custom_call.1']
    %12 = vsyncpa [#allocation3], 0
    %s13 = scalar_lea.sflag [#allocation3], 1
    %14 = vsyncpa %s13, 0
    %15 = vsyncpa [#allocation6], 0
    %16 = vsyncpa [#allocation4], 0
    %s17 = scalar_lea.sflag [#allocation4], 1
    %18 = vsyncpa %s17, 0
    %19 = vsyncpa [#allocation9], 0
    %s20 = scalar_lea.sflag [#allocation9], 1
    %21 = vsyncpa %s20, 0
    loop: start=0, step=1, limit=4
    $region2: #{tpu_custom_call.1} parent=1 // loop_pre_header
      _
    $region3: #{tpu_custom_call.1} parent=1 // loop_header
      %s23 = sphi 0, %s27
      %p24 = scmp.ge.s32.totalorder %s23, 4
      %s30 = sphi 0, %s42
      %s31 = sphi 0, %s38
      %s32 = sphi 0, %s30
      %s33 = sphi 0, %s31
      %s34 = sphi 0, %s32
      %s35 = sphi 0, %s33
      %s47 = sphi 0, %s49
      %s50 = sphi 0, %s47
      %s51 = sphi 0, %s50
      %s67 = sphi 0, %s51
      %s71 = sphi 0, %s71
      %s73 = sphi 0, %s71
      %s74 = sphi 0, %s73
      %s88 = sphi 0, %s74
      %s92 = sphi 0, %s92
      %s94 = sphi 0, %s92
      %s95 = sphi 0, %s94
      %s109 = sphi 0, %s95
      %s113 = sphi 0, %s113
      %s115 = sphi 0, %s113
      %s116 = sphi 0, %s115
      %s130 = sphi 0, %s116
      %s134 = sphi 0, %s134
      %s136 = sphi 0, %s134
      %s137 = sphi 0, %s136
      %s151 = sphi 0, %s137
      %s159 = sphi 0, %s161
      %s162 = sphi 0, %s159
      %s163 = sphi 0, %s162
      %s179 = sphi 0, %s163
      %s187 = sphi 0, %s189
      %s190 = sphi 0, %s187
      %s191 = sphi 0, %s190
      %s207 = sphi 0, %s191
    $region4: #{tpu_custom_call.1} parent=1 // loop_header_branch
      %26 = sbr.rel (%p24) target = $region8
    $region5: #{tpu_custom_call.1} parent=1 // loop_body
      %s28 = ssub.s32 %s23, 1
      %s29 = ssub.s32 %s23, 2
      %s36 = sadd.s32 1, %s31
      %p37 = scmp.ge.s32.totalorder %s36, 1
      %s38 = scalar_select %p37, 0, %s36
      %s39 = sadd.s32 1, %s30
      %s40 = scalar_select %p37, %s39, %s30
      %p41 = scmp.ge.s32.totalorder %s40, 2
      %s42 = scalar_select %p41, 0, %s40
      %s43 = ssub.s32 %s30, %s42
      %s44 = ssub.s32 %s31, %s38
      %s45 = sor.u32 %s43, %s44
      %p46 = scmp.eq.s32.totalorder %s45, 0
      %s48 = sadd.s32 %s47, 1
      %s49 = scalar_select %p46, %s47, %s48
      %p52 = pneg %p46
      %p53 = scmp.eq.s32.totalorder %s23, 1
      %p54 = por %p52, %p53
      %p55 = scmp.ne.s32.totalorder %s47, %s50
      %p56 = scmp.eq.s32.totalorder %s23, 0
      %p57 = por %p55, %p56
      %p58 = scmp.ne.s32.totalorder %s47, %s50
      %p59 = scmp.eq.s32.totalorder %s28, 1
      %p60 = por %p58, %p59
      %p61 = scmp.ne.s32.totalorder %s50, %s51
      %p62 = scmp.eq.s32.totalorder %s28, 0
      %p63 = por %p61, %p62
      %p64 = scmp.ne.s32.totalorder %s50, %s51
      %p65 = scmp.eq.s32.totalorder %s29, 1
      %p66 = por %p64, %p65
      %p68 = scmp.ne.s32.totalorder %s51, %s67
      %p69 = scmp.eq.s32.totalorder %s29, 0
      %p70 = por %p68, %p69
      %s72 = sadd.s32 %s71, 1
      %p75 = scmp.eq.s32.totalorder %s23, 1
      %p76 = scmp.ne.s32.totalorder %s71, %s73
      %p77 = scmp.eq.s32.totalorder %s23, 0
      %p78 = por %p76, %p77
      %p79 = scmp.ne.s32.totalorder %s71, %s73
      %p80 = scmp.eq.s32.totalorder %s28, 1
      %p81 = por %p79, %p80
      %p82 = scmp.ne.s32.totalorder %s73, %s74
      %p83 = scmp.eq.s32.totalorder %s28, 0
      %p84 = por %p82, %p83
      %p85 = scmp.ne.s32.totalorder %s73, %s74
      %p86 = scmp.eq.s32.totalorder %s29, 1
      %p87 = por %p85, %p86
      %p89 = scmp.ne.s32.totalorder %s74, %s88
      %p90 = scmp.eq.s32.totalorder %s29, 0
      %p91 = por %p89, %p90
      %s93 = sadd.s32 %s92, 1
      %p96 = scmp.eq.s32.totalorder %s23, 1
      %p97 = scmp.ne.s32.totalorder %s92, %s94
      %p98 = scmp.eq.s32.totalorder %s23, 0
      %p99 = por %p97, %p98
      %p100 = scmp.ne.s32.totalorder %s92, %s94
      %p101 = scmp.eq.s32.totalorder %s28, 1
      %p102 = por %p100, %p101
      %p103 = scmp.ne.s32.totalorder %s94, %s95
      %p104 = scmp.eq.s32.totalorder %s28, 0
      %p105 = por %p103, %p104
      %p106 = scmp.ne.s32.totalorder %s94, %s95
      %p107 = scmp.eq.s32.totalorder %s29, 1
      %p108 = por %p106, %p107
      %p110 = scmp.ne.s32.totalorder %s95, %s109
      %p111 = scmp.eq.s32.totalorder %s29, 0
      %p112 = por %p110, %p111
      %s114 = sadd.s32 %s113, 1
      %p117 = scmp.eq.s32.totalorder %s23, 1
      %p118 = scmp.ne.s32.totalorder %s113, %s115
      %p119 = scmp.eq.s32.totalorder %s23, 0
      %p120 = por %p118, %p119
      %p121 = scmp.ne.s32.totalorder %s113, %s115
      %p122 = scmp.eq.s32.totalorder %s28, 1
      %p123 = por %p121, %p122
      %p124 = scmp.ne.s32.totalorder %s115, %s116
      %p125 = scmp.eq.s32.totalorder %s28, 0
      %p126 = por %p124, %p125
      %p127 = scmp.ne.s32.totalorder %s115, %s116
      %p128 = scmp.eq.s32.totalorder %s29, 1
      %p129 = por %p127, %p128
      %p131 = scmp.ne.s32.totalorder %s116, %s130
      %p132 = scmp.eq.s32.totalorder %s29, 0
      %p133 = por %p131, %p132
      %s135 = sadd.s32 %s134, 1
      %p138 = scmp.eq.s32.totalorder %s23, 1
      %p139 = scmp.ne.s32.totalorder %s134, %s136
      %p140 = scmp.eq.s32.totalorder %s23, 0
      %p141 = por %p139, %p140
      %p142 = scmp.ne.s32.totalorder %s134, %s136
      %p143 = scmp.eq.s32.totalorder %s28, 1
      %p144 = por %p142, %p143
      %p145 = scmp.ne.s32.totalorder %s136, %s137
      %p146 = scmp.eq.s32.totalorder %s28, 0
      %p147 = por %p145, %p146
      %p148 = scmp.ne.s32.totalorder %s136, %s137
      %p149 = scmp.eq.s32.totalorder %s29, 1
      %p150 = por %p148, %p149
      %p152 = scmp.ne.s32.totalorder %s137, %s151
      %p153 = scmp.eq.s32.totalorder %s29, 0
      %p154 = por %p152, %p153
      %s155 = ssub.s32 %s30, %s42
      %s156 = ssub.s32 %s31, %s38
      %s157 = sor.u32 %s155, %s156
      %p158 = scmp.eq.s32.totalorder %s157, 0
      %s160 = sadd.s32 %s159, 1
      %s161 = scalar_select %p158, %s159, %s160
      %p164 = pneg %p158
      %p165 = scmp.eq.s32.totalorder %s23, 1
      %p166 = por %p164, %p165
      %p167 = scmp.ne.s32.totalorder %s159, %s162
      %p168 = scmp.eq.s32.totalorder %s23, 0
      %p169 = por %p167, %p168
      %p170 = scmp.ne.s32.totalorder %s159, %s162
      %p171 = scmp.eq.s32.totalorder %s28, 1
      %p172 = por %p170, %p171
      %p173 = scmp.ne.s32.totalorder %s162, %s163
      %p174 = scmp.eq.s32.totalorder %s28, 0
      %p175 = por %p173, %p174
      %p176 = scmp.ne.s32.totalorder %s162, %s163
      %p177 = scmp.eq.s32.totalorder %s29, 1
      %p178 = por %p176, %p177
      %p180 = scmp.ne.s32.totalorder %s163, %s179
      %p181 = scmp.eq.s32.totalorder %s29, 0
      %p182 = por %p180, %p181
      %s183 = ssub.s32 %s30, %s42
      %s184 = ssub.s32 %s31, %s38
      %s185 = sor.u32 %s183, %s184
      %p186 = scmp.eq.s32.totalorder %s185, 0
      %s188 = sadd.s32 %s187, 1
      %s189 = scalar_select %p186, %s187, %s188
      %p192 = pneg %p186
      %p193 = scmp.eq.s32.totalorder %s23, 1
      %p194 = por %p192, %p193
      %p195 = scmp.ne.s32.totalorder %s187, %s190
      %p196 = scmp.eq.s32.totalorder %s23, 0
      %p197 = por %p195, %p196
      %p198 = scmp.ne.s32.totalorder %s187, %s190
      %p199 = scmp.eq.s32.totalorder %s28, 1
      %p200 = por %p198, %p199
      %p201 = scmp.ne.s32.totalorder %s190, %s191
      %p202 = scmp.eq.s32.totalorder %s28, 0
      %p203 = por %p201, %p202
      %p204 = scmp.ne.s32.totalorder %s190, %s191
      %p205 = scmp.eq.s32.totalorder %s29, 1
      %p206 = por %p204, %p205
      %p208 = scmp.ne.s32.totalorder %s191, %s207
      %p209 = scmp.eq.s32.totalorder %s29, 0
      %p210 = por %p208, %p209
      %p211 = scmp.le.s32.totalorder 1, %s23
      %p212 = scmp.lt.s32.totalorder %s23, 3
      %p213 = pnand %p211, %p212
      %p214 = pneg %p213
      // Predicated region
      $region9: #{tpu_custom_call.1} parent=5 // pred_check
        _
      $region10: #{tpu_custom_call.1} parent=5 // pred_check_branch
        %216 = sbr.rel (%p213) target = $region12
      $region11: #{tpu_custom_call.1} parent=5 // pred_region
        %s217 = ssub.s32 %s23, 1
        // Predicated region
        $region13: #{tpu_custom_call.1} parent=11 // pred_check
          %p218 = pneg %p84
        $region14: #{tpu_custom_call.1} parent=11 // pred_check_branch
          %220 = sbr.rel (%p218) target = $region16
        $region15: #{tpu_custom_call.1} parent=11 // pred_region
          _
        $region16: #{tpu_custom_call.1} parent=11 // pred_fallthru
          _
        // Predicated region
        $region17: #{tpu_custom_call.1} parent=11 // pred_check
          %p221 = pneg %p105
        $region18: #{tpu_custom_call.1} parent=11 // pred_check_branch
          %223 = sbr.rel (%p221) target = $region20
        $region19: #{tpu_custom_call.1} parent=11 // pred_region
          _
        $region20: #{tpu_custom_call.1} parent=11 // pred_fallthru
          _
        // Predicated region
        $region21: #{tpu_custom_call.1} parent=11 // pred_check
          %p224 = pneg %p126
        $region22: #{tpu_custom_call.1} parent=11 // pred_check_branch
          %226 = sbr.rel (%p224) target = $region24
        $region23: #{tpu_custom_call.1} parent=11 // pred_region
          %s228 = ssub.s32 256, 256
          %229 = vsyncadd [#allocation6], %s228
          %s230 = sshll.u32 [#allocation5], 4
          %s231 = int_to_ptr.vmem [resolvable:$true] %s230
          %236 = dma.hbm_to_vmem [thread:$0]  %s3, 256, %s231, [#allocation6], 64, 64, 4
        $region24: #{tpu_custom_call.1} parent=11 // pred_fallthru
          _
        // Predicated region
        $region25: #{tpu_custom_call.1} parent=11 // pred_check
          %p237 = pneg %p147
        $region26: #{tpu_custom_call.1} parent=11 // pred_check_branch
          %239 = sbr.rel (%p237) target = $region28
        $region27: #{tpu_custom_call.1} parent=11 // pred_region
          _
        $region28: #{tpu_custom_call.1} parent=11 // pred_fallthru
          _
      $region12: #{tpu_custom_call.1} parent=5 // pred_fallthru
        _
      %p240 = scmp.lt.s32.totalorder %s23, 2
      // Predicated region
      $region29: #{tpu_custom_call.1} parent=5 // pred_check
        %p241 = pneg %p240
      $region30: #{tpu_custom_call.1} parent=5 // pred_check_branch
        %243 = sbr.rel (%p241) target = $region32
      $region31: #{tpu_custom_call.1} parent=5 // pred_region
        // Predicated region
        $region33: #{tpu_custom_call.1} parent=31 // pred_check
          %p244 = pneg %p57
        $region34: #{tpu_custom_call.1} parent=31 // pred_check_branch
          %246 = sbr.rel (%p244) target = $region36
        $region35: #{tpu_custom_call.1} parent=31 // pred_region
          %s247 = sand.u32 %s47, 1
          %s248 = scalar_lea.sflag [#allocation3], %s247
          %s249 = sand.u32 %s47, 1
          %s250 = smul.addr %s249, 8
          %s251 = scalar_lea.vmem [#allocation2], %s250
          %s253 = ssub.s32 128, 128
          %254 = vsyncadd %s248, %s253
          %s255 = sadd.s32 %s31, %s30
          %s256 = smul.addr %s255, 128
          %s257 = scalar_lea.hbm %s0, %s256
          %s259 = sshll.u32 %s251, 4
          %s260 = int_to_ptr.vmem [resolvable:$true] %s259
          %262 = dma.hbm_to_vmem [thread:$0]  %s257, 128, %s260, %s248
        $region36: #{tpu_custom_call.1} parent=31 // pred_fallthru
          _
      $region32: #{tpu_custom_call.1} parent=5 // pred_fallthru
        _
      %p263 = scmp.le.s32.totalorder 1, %s23
      %p264 = scmp.lt.s32.totalorder %s23, 3
      %p265 = pnand %p263, %p264
      %p266 = pneg %p265
      // Predicated region
      $region37: #{tpu_custom_call.1} parent=5 // pred_check
        _
      $region38: #{tpu_custom_call.1} parent=5 // pred_check_branch
        %268 = sbr.rel (%p265) target = $region40
      $region39: #{tpu_custom_call.1} parent=5 // pred_region
        %s269 = ssub.s32 %s23, 1
        %s270 = sand.u32 %s50, 1
        %s271 = scalar_lea.sflag [#allocation3], %s270
        %s272 = sand.u32 %s50, 1
        %s273 = smul.addr %s272, 8
        %s274 = scalar_lea.vmem [#allocation2], %s273
        // Predicated region
        $region41: #{tpu_custom_call.1} parent=39 // pred_check
          %p275 = pneg %p63
        $region42: #{tpu_custom_call.1} parent=39 // pred_check_branch
          %277 = sbr.rel (%p275) target = $region44
        $region43: #{tpu_custom_call.1} parent=39 // pred_region
          %278 = dma.done %s271, 128
        $region44: #{tpu_custom_call.1} parent=39 // pred_fallthru
          _
        // Predicated region
        $region45: #{tpu_custom_call.1} parent=39 // pred_check
          %p279 = pneg %p126
        $region46: #{tpu_custom_call.1} parent=39 // pred_check_branch
          %281 = sbr.rel (%p279) target = $region48
        $region47: #{tpu_custom_call.1} parent=39 // pred_region
          %282 = dma.done [#allocation6], 256
        $region48: #{tpu_custom_call.1} parent=39 // pred_fallthru
          _
        %s283 = sand.u32 %s50, 1
        %s284 = scalar_lea.sflag [#allocation3], %s283
        %s285 = sand.u32 %s50, 1
        %s286 = smul.addr %s285, 8
        %s287 = scalar_lea.vmem [#allocation2], %s286
        %p288 = pneg %p63
        %p289 = pneg %p60
        %p290 = pneg %p84
        %p291 = pneg %p81
        %p292 = pneg %p105
        %p293 = pneg %p102
        %p294 = pneg %p126
        %p295 = pneg %p123
        %p296 = pneg %p147
        %p297 = pneg %p144
        %p298 = pneg %p175
        %p299 = pneg %p172
        %s300 = sand.u32 %s162, 1
        %s301 = scalar_lea.sflag [#allocation4], %s300
        %s302 = sand.u32 %s162, 1
        %s303 = smul.addr %s302, 4
        %s304 = scalar_lea.vmem [#allocation7], %s303
        %p305 = pneg %p203
        %p306 = pneg %p200
        %s307 = sand.u32 %s190, 1
        %s308 = scalar_lea.sflag [#allocation9], %s307
        %s309 = sand.u32 %s190, 1
        %s310 = smul.addr %s309, 4
        %s311 = scalar_lea.vmem [#allocation8], %s310
        %v313 = vld [vmem:[%s274] sm:$0xff]
        %v314 = vld [vmem:[%s1] sm:$0x1]
        %v315 = vld [vmem:[%s2] sm:$0x1]
        %vm316 = vcmask 261120
        %v317 = vsel %vm316, %v313, 0.0
        %318 = vadd.xlane.f32.xlu0 %v317
        %v319 = vpop.xlane.xlu0 %318
        %v320 = vrcp.pop 32.0
        %v321 = vmul.f32 %v319, %v320
        %v322 = vsub.f32 %v313, %v321
        %v323 = vmul.f32 %v322, %v322
        %v324 = vsel %vm316, %v323, 0.0
        %325 = vadd.xlane.f32.xlu0 %v324
        %v326 = vpop.xlane.xlu0 %325
        %v327 = vmul.f32 %v326, %v320
        %v328 = vadd.f32 %v327, 1e-05
        %v329 = vrsqrt.pop %v328
        %v330 = vmul.f32 %v322, %v329
        %v332 = vlaneseq
        %v333 = vshrl.u32 %v332, 7
        %v334 = vsub.s32 0, %v333
        %v335 = vrot.slane %v314, %v334
        %v337 = vmul.f32 %v330, %v335
        %v339 = vlaneseq
        %v340 = vshrl.u32 %v339, 7
        %v341 = vsub.s32 0, %v340
        %v342 = vrot.slane %v315, %v341
        %v344 = vadd.f32 %v337, %v342
        %v345 = vld [vmem:[#allocation5] sm:$0xf]
        %v346 = vld [vmem:[#allocation5 + $0x4] sm:$0xf]
        %v347 = vld [vmem:[#allocation5 + $0x8] sm:$0xf]
        %v348 = vld [vmem:[#allocation5 + $0xc] sm:$0xf]
        %v349 = vpack.c.bf16 %v344, %v344
        %v350 = vld [vmem:[%s4] sm:$0x1]
        %v352 = vlaneseq
        %v353 = vshrl.u32 %v352, 7
        %v354 = vsub.s32 0, %v353
        %v355 = vrot.slane %v350, %v354
        %v361 = vunpack.c.l.b16 %v345
        %v362 = vunpack.c.l.b16 %v346
        %v363 = vunpack.c.l.b16 %v347
        %v364 = vunpack.c.l.b16 %v348
        %v365 = vpack.c.b16 %v362, %v361
        %v366 = vpack.c.b16 %v364, %v363
        %v370 = vsel %vm316, %v349, 0
        %372 = vmatprep.subr.bf16.mxu0 0
        %373 = vmatpush1.bf16.msra.mxu0 %v365
        %374 = vmatprep.subr.bf16.mxu0 0
        %375 = vmatpush1.bf16.msra.mxu0 %v366
        %376 = vmatprep.subr.bf16.mxu0 0
        %377 = vmatpush1.bf16.msra.mxu0 0
        %378 = vmatprep.subr.bf16.mxu0 0
        %379 = vmatpush1.bf16.msra.mxu0 0
        %380 = vmatprep.subr.bf16.mxu0 0
        %381 = vmatpush1.bf16.msra.mxu0 0
        %382 = vmatprep.subr.bf16.mxu0 0
        %383 = vmatpush1.bf16.msra.mxu0 0
        %384 = vmatprep.subr.bf16.mxu0 0
        %385 = vmatpush1.bf16.msra.mxu0 0
        %386 = vmatprep.subr.bf16.mxu0 0
        %387 = vmatpush1.bf16.msra.mxu0 0
        %388 = vmatprep.subr.bf16.mxu0 0
        %389 = vmatpush1.bf16.msra.mxu0 0
        %390 = vmatprep.subr.bf16.mxu0 0
        %391 = vmatpush1.bf16.msra.mxu0 0
        %392 = vmatprep.subr.bf16.mxu0 0
        %393 = vmatpush1.bf16.msra.mxu0 0
        %394 = vmatprep.subr.bf16.mxu0 0
        %395 = vmatpush1.bf16.msra.mxu0 0
        %396 = vmatprep.subr.bf16.mxu0 0
        %397 = vmatpush1.bf16.msra.mxu0 0
        %398 = vmatprep.subr.bf16.mxu0 0
        %399 = vmatpush1.bf16.msra.mxu0 0
        %400 = vmatprep.subr.bf16.mxu0 0
        %401 = vmatpush1.bf16.msra.mxu0 0
        %402 = vmatprep.subr.bf16.mxu0 0
        %403 = vmatpush1.bf16.msra.mxu0 0
        %404 = vmatprep.mubr.bf16.mxu0 0
        %405 = vmatmul.mubr.bf16.gmra.mrb[0].mxu0 %v370
        %v406 = vpop.f32.mrb[0].mxu0
        %v407 = vadd.f32 %v355, %v406
        %v408 = vpop.f32.mrb[0].mxu0
        %v409 = vpop.f32.mrb[0].mxu0
        %v410 = vpop.f32.mrb[0].mxu0
        %411 = vdwg.mxu0
        %v412 = vpack.c.bf16 %v407, %v407
        %vm413 = vcmask 257024
        %414 = vst.msk [vmem:[%s304] sm:$0xf] %vm413, %v412
        %v416 = vunpack.c.l.b16 %v412
        %v417 = vpack.c.b16 %v416, %v416
        %418 = vrot.lane.b32.xlu0 %v417, 96
        %v419 = vpop.permute.xlu0 %418
        %vm421 = vcmask 519168
        %422 = vst.msk [vmem:[%s311] sm:$0xf] %vm421, %v419
        %s423 = sand.u32 %s162, 1
        %s424 = scalar_lea.sflag [#allocation4], %s423
        %s425 = sand.u32 %s162, 1
        %s426 = smul.addr %s425, 4
        %s427 = scalar_lea.vmem [#allocation7], %s426
        %s428 = sand.u32 %s190, 1
        %s429 = scalar_lea.sflag [#allocation9], %s428
        %s430 = sand.u32 %s190, 1
        %s431 = smul.addr %s430, 4
        %s432 = scalar_lea.vmem [#allocation8], %s431
        // Predicated region
        $region49: #{tpu_custom_call.1} parent=39 // pred_check
          %p433 = pneg %p172
        $region50: #{tpu_custom_call.1} parent=39 // pred_check_branch
          %435 = sbr.rel (%p433) target = $region52
        $region51: #{tpu_custom_call.1} parent=39 // pred_region
          %s437 = ssub.s32 64, 64
          %438 = vsyncadd %s424, %s437
          %s439 = sadd.s32 %s33, %s32
          %s440 = smul.addr %s439, 64
          %s441 = scalar_lea.hbm %s5, %s440
          %s443 = sshll.u32 %s427, 4
          %s444 = int_to_ptr.vmem [resolvable:$true] %s443
          %446 = dma.vmem_to_hbm [thread:$0]  %s444, 64, %s441, %s424
        $region52: #{tpu_custom_call.1} parent=39 // pred_fallthru
          _
        // Predicated region
        $region53: #{tpu_custom_call.1} parent=39 // pred_check
          %p447 = pneg %p200
        $region54: #{tpu_custom_call.1} parent=39 // pred_check_branch
          %449 = sbr.rel (%p447) target = $region56
        $region55: #{tpu_custom_call.1} parent=39 // pred_region
          %s451 = ssub.s32 64, 64
          %452 = vsyncadd %s429, %s451
          %s453 = sadd.s32 %s33, %s32
          %s454 = smul.addr %s453, 64
          %s455 = scalar_lea.hbm %s6, %s454
          %s457 = sshll.u32 %s432, 4
          %s458 = int_to_ptr.vmem [resolvable:$true] %s457
          %460 = dma.vmem_to_hbm [thread:$0]  %s458, 64, %s455, %s429
        $region56: #{tpu_custom_call.1} parent=39 // pred_fallthru
          _
      $region40: #{tpu_custom_call.1} parent=5 // pred_fallthru
        _
      %p461 = scmp.le.s32.totalorder 2, %s23
      // Predicated region
      $region57: #{tpu_custom_call.1} parent=5 // pred_check
        %p462 = pneg %p461
      $region58: #{tpu_custom_call.1} parent=5 // pred_check_branch
        %464 = sbr.rel (%p462) target = $region60
      $region59: #{tpu_custom_call.1} parent=5 // pred_region
        %s465 = ssub.s32 %s23, 2
        // Predicated region
        $region61: #{tpu_custom_call.1} parent=59 // pred_check
          %p466 = pneg %p178
        $region62: #{tpu_custom_call.1} parent=59 // pred_check_branch
          %468 = sbr.rel (%p466) target = $region64
        $region63: #{tpu_custom_call.1} parent=59 // pred_region
          %s469 = sand.u32 %s163, 1
          %s470 = scalar_lea.sflag [#allocation4], %s469
          %s471 = sand.u32 %s163, 1
          %s472 = smul.addr %s471, 4
          %s473 = scalar_lea.vmem [#allocation7], %s472
          %474 = dma.done %s470, 64
        $region64: #{tpu_custom_call.1} parent=59 // pred_fallthru
          _
        // Predicated region
        $region65: #{tpu_custom_call.1} parent=59 // pred_check
          %p475 = pneg %p206
        $region66: #{tpu_custom_call.1} parent=59 // pred_check_branch
          %477 = sbr.rel (%p475) target = $region68
        $region67: #{tpu_custom_call.1} parent=59 // pred_region
          %s478 = sand.u32 %s191, 1
          %s479 = scalar_lea.sflag [#allocation9], %s478
          %s480 = sand.u32 %s191, 1
          %s481 = smul.addr %s480, 4
          %s482 = scalar_lea.vmem [#allocation8], %s481
          %483 = dma.done %s479, 64
        $region68: #{tpu_custom_call.1} parent=59 // pred_fallthru
          _
      $region60: #{tpu_custom_call.1} parent=5 // pred_fallthru
        _
    $region6: #{tpu_custom_call.1} parent=1 // loop_footer
      %s27 = sadd.s32 1, %s23
    $region7: #{tpu_custom_call.1} parent=1 // loop_footer_branch
      %22 = sbr.rel target = $region3
    $region8: #{tpu_custom_call.1} parent=1 // loop_exit
      _
    %484 = vsyncpa [#allocation3], 1
    %s485 = scalar_lea.sflag [#allocation3], 1
    %486 = vsyncpa %s485, 1
    %487 = vsyncpa [#allocation6], 1
    %488 = vsyncpa [#allocation4], 1
    %s489 = scalar_lea.sflag [#allocation4], 1
    %490 = vsyncpa %s489, 1
    %491 = vsyncpa [#allocation9], 1
    %s492 = scalar_lea.sflag [#allocation9], 1
    %493 = vsyncpa %s492, 1

</llo_original>
